<compile_context>
chip_gen: v7x
topology: tpu7x:2x2x1
jax: 0.10.0
libtpu: 0.0.40
codegen_flags: <defaults>
</compile_context>

<pallas_src>
import numpy as np
import jax
import jax.numpy as jnp
from jax.experimental import pallas as pl
from jax.experimental.pallas import tpu as pltpu


def create_sinusoidal_embeddings(n_pos: int, dim: int) -> jnp.ndarray:
    """Deterministic sinusoidal init, matching the PyTorch helper exactly."""
    position_enc = np.array(
        [[pos / np.power(10000, 2 * (j // 2) / dim) for j in range(dim)]
         for pos in range(n_pos)],
        dtype=np.float64,
    )
    out = np.zeros((n_pos, dim), dtype=np.float32)
    out[:, 0::2] = np.sin(position_enc[:, 0::2])
    out[:, 1::2] = np.cos(position_enc[:, 1::2])
    return jnp.asarray(out)


def _round_up(x: int, m: int) -> int:
    return ((x + m - 1) // m) * m


def _pos_embed_kernel(tbl_ref, out_ref):
    # tbl_ref: (1, lt)   lane-dense slab of the flattened table rows [0, N)
    # out_ref: (bt, lt)  same slab replicated across the batch tile
    out_ref[...] = jnp.broadcast_to(tbl_ref[...], out_ref.shape)


def segment_pos_embeddings(embeddings: jnp.ndarray,
                           pos_table: jnp.ndarray,
                           *,
                           target_block_bytes: int = 8 << 20,
                           lane_tile_bytes: int = 256 << 10) -> jnp.ndarray:
    """Pallas equivalent of SegmentPosEmbeddings.forward.

    embeddings: (B, N, F)   -- only its shape matters (like the PyTorch module)
    pos_table:  (P, D)      -- nn.Embedding weight
    returns:    (B, N, D), dtype of pos_table
    """
    bsize, numf, _ = embeddings.shape
    max_pos, d_model = pos_table.shape
    assert numf <= max_pos, "sequence length exceeds max_position_embeddings"

    dtype = pos_table.dtype
    esize = dtype.itemsize
    total = numf * d_model                                     # flattened length

    # ---- lane tile: full extent if small, else a multiple of 128 (<=256 KiB) ---
    lane_cap = max(128, ((lane_tile_bytes // esize) // 128) * 128)
    lt = total if total <= lane_cap else lane_cap
    n_lane = pl.cdiv(total, lt)

    # ---- batch tile: ~target_block_bytes per output block, multiple of 8 -------
    bt_target = max(1, target_block_bytes // (lt * esize))
    if bt_target >= bsize:
        bt = bsize
    else:
        bt = (bt_target // 8) * 8
        if bt < 8:
            bt = bsize if bsize <= 8 else 8
    n_batch = pl.cdiv(bsize, bt)

    # ---- megacore (v7x): guarantee >= 2 grid steps when the problem allows -----
    if n_lane * n_batch < 2:
        if total >= 256:
            lt = _round_up(pl.cdiv(total, 2), 128)
            n_lane = pl.cdiv(total, lt)
        elif bsize >= 16:
            bt = _round_up(pl.cdiv(bsize, 2), 8)
            n_batch = pl.cdiv(bsize, bt)
        # else: tiny problem; a (1, 1) grid is fine.

    # Batch innermost so the table block index is constant along the inner axis
    # (Pallas skips the re-fetch when the block index does not change).
    grid = (n_lane, n_batch)

    # Flatten the first `numf` table rows into one lane-dense row (no padding;
    # ragged edge blocks are handled by Pallas; reshape is metadata-only).
    tbl_flat = pos_table[:numf].reshape(1, total)

    # Real double-buffered VMEM footprint: (1, lt) input block is sublane-padded
    # to 8 rows; output block is (bt rounded to 8, lt).
    vmem_need = 2 * 8 * lt * esize + 2 * _round_up(bt, 8) * lt * esize
    vmem_limit = int(min(48 << 20, max(2 * vmem_need, 16 << 20)))

    # Pure-bandwidth op: slab read once per lane tile, output written once.
    bytes_accessed = (bsize * total + total) * esize

    out_flat = pl.pallas_call(
        _pos_embed_kernel,
        out_shape=jax.ShapeDtypeStruct((bsize, total), dtype),
        grid_spec=pltpu.PrefetchScalarGridSpec(
            num_scalar_prefetch=0,
            grid=grid,
            in_specs=[
                pl.BlockSpec((1, lt), lambda l, b: (0, l)),
            ],
            out_specs=pl.BlockSpec((bt, lt), lambda l, b: (b, l)),
        ),
        compiler_params=pltpu.CompilerParams(
            dimension_semantics=("parallel", "parallel"),
            vmem_limit_bytes=vmem_limit,
        ),
        cost_estimate=pl.CostEstimate(
            flops=0, transcendentals=0, bytes_accessed=bytes_accessed),
    )(tbl_flat)

    # Row-major contiguous -> metadata-only reshape (no extra HBM traffic).
    return out_flat.reshape(bsize, numf, d_model)


if __name__ == "__main__":
    # Small shapes consistent with the module.
    bsize, numf, d_model = 2, 8, 32
    max_position_embeddings = 16
    sinusoidal_pos_embds = True

    key = jax.random.PRNGKey(0)
    # `embeddings` input: only its shape is used by forward().
    embeddings = jax.random.normal(key, (bsize, numf, d_model), dtype=jnp.float32)

    if sinusoidal_pos_embds:
        pos_table = create_sinusoidal_embeddings(max_position_embeddings, d_model)
    else:
        pos_table = jax.random.normal(
            jax.random.PRNGKey(1), (max_position_embeddings, d_model),
            dtype=jnp.float32)

    out = segment_pos_embeddings(embeddings, pos_table)
    out = jax.block_until_ready(out)

    # Reference check (pure JAX): table[arange(N)] broadcast over batch.
    ref = jnp.broadcast_to(pos_table[:numf][None, :, :], (bsize, numf, d_model))
    np.testing.assert_allclose(np.asarray(out), np.asarray(ref), rtol=0, atol=0)
    assert out.dtype == pos_table.dtype and out.shape == (bsize, numf, d_model)

    print("KERNEL_OK")
</pallas_src>

<mosaic_0001>
module attributes {stable_mosaic.version = 11 : i64} {
  func.func @_pos_embed_kernel(%arg0: i32, %arg1: i32, %arg2: memref<1x128xf32, #tpu.memory_space<vmem>>, %arg3: memref<2x128xf32, #tpu.memory_space<vmem>>) attributes {dimension_semantics = [#tpu.dimension_semantics<parallel>, #tpu.dimension_semantics<parallel>], iteration_bounds = array<i64: 2, 1>, scalar_prefetch = 0 : i64, scratch_operands = 0 : i64, tpu.core_type = #tpu.core_type<tc>, window_params = [{transform_indices = @transform_0, window_bounds = array<i64: 1, 128>}, {transform_indices = @transform_1, window_bounds = array<i64: 2, 128>}]} {
    %c0 = arith.constant 0 : index
    %c0_0 = arith.constant 0 : index
    %0 = vector.load %arg2[%c0, %c0_0] : memref<1x128xf32, #tpu.memory_space<vmem>>, vector<1x128xf32>
    %1 = vector.shape_cast %0 : vector<1x128xf32> to vector<1x128xf32>
    %2 = vector.broadcast %1 : vector<1x128xf32> to vector<2x128xf32>
    %c0_1 = arith.constant 0 : index
    %c0_2 = arith.constant 0 : index
    %3 = vector.load %arg3[%c0_1, %c0_2] : memref<2x128xf32, #tpu.memory_space<vmem>>, vector<2x128xf32>
    tpu.vector_store %arg3[%c0_1, %c0_2], %2 {strides = array<i32>} : memref<2x128xf32, #tpu.memory_space<vmem>>, vector<2x128xf32>,
    return
  }
  func.func @transform_0(%arg0: i32, %arg1: i32) -> (i32, i32) {
    %c0_i32 = arith.constant 0 : i32
    %c0_i32_0 = arith.constant 0 : i32
    return %c0_i32, %arg0 : i32, i32
  }
  func.func @transform_1(%arg0: i32, %arg1: i32) -> (i32, i32) {
    %c0_i32 = arith.constant 0 : i32
    return %arg1, %arg0 : i32, i32
  }
}

</mosaic_0001>

<llo_original>
// kernel: tpu_custom_call.1
$region0: #{tpu_custom_call.1}
  #allocation0 [shape = 'u32[]', space=smem, size = 0x4, offset = 0x4, fixed_abs, tag = 'smem constant byte address 0x4 - core index']
  #allocation1 [shape = 'u32[144,128]{1,0:T(1,128)}', space=vmem, size = 0x12000, scoped, tag = 'internal scratch']
  %s0 = inlined_call_operand.hbm [shape: f32[1,256], index: 0, kind: input, shape index: {}]
  %s1 = inlined_call_operand.hbm [shape: f32[2,256], index: 1, kind: output, shape index: {}]
  %s2 = sld [smem:[#allocation0]]
  $region41: #{tpu_custom_call.1} parent=0
    _
  %s4 = ssub.s32 1, %s2
  %s5 = scalar_select 0, %s4, %s2
  $region1: #{tpu_custom_call.1} parent=0
    #allocation2 [shape = 'u8[1024]{0}', space=vmem, size = 0x400, scoped, tag = 'input window, operand 0']
    #allocation3 [shape = 's32[2]{0}', space=sflag, size = 0x8, scoped, tag = 'scoped memory for tpu_custom_call.1']
    #allocation4 [shape = 's32[2]{0}', space=sflag, size = 0x8, scoped, tag = 'scoped memory for tpu_custom_call.1']
    #allocation5 [shape = 'u8[2048]{0}', space=vmem, size = 0x800, scoped, tag = 'output window, operand 0']
    %6 = vsyncpa [#allocation3], 0
    %s7 = scalar_lea.sflag [#allocation3], 1
    %8 = vsyncpa %s7, 0
    %9 = vsyncpa [#allocation4], 0
    %s10 = scalar_lea.sflag [#allocation4], 1
    %11 = vsyncpa %s10, 0
    loop: start=0, step=1, limit=4
    $region2: #{tpu_custom_call.1} parent=1 // loop_pre_header
      _
    $region3: #{tpu_custom_call.1} parent=1 // loop_header
      %s13 = sphi 0, %s17
      %p14 = scmp.ge.s32.totalorder %s13, 4
      %s20 = sphi 0, %s32
      %s21 = sphi 0, %s28
      %s22 = sphi 0, %s20
      %s23 = sphi 0, %s21
      %s24 = sphi 0, %s22
      %s25 = sphi 0, %s23
      %s35 = sphi 0, %s37
      %s38 = sphi 0, %s35
      %s39 = sphi 0, %s38
      %s55 = sphi 0, %s39
      %s63 = sphi 0, %s65
      %s66 = sphi 0, %s63
      %s67 = sphi 0, %s66
      %s83 = sphi 0, %s67
    $region4: #{tpu_custom_call.1} parent=1 // loop_header_branch
      %16 = sbr.rel (%p14) target = $region8
    $region5: #{tpu_custom_call.1} parent=1 // loop_body
      %s18 = ssub.s32 %s13, 1
      %s19 = ssub.s32 %s13, 2
      %s26 = sadd.s32 1, %s21
      %p27 = scmp.ge.s32.totalorder %s26, 1
      %s28 = scalar_select %p27, 0, %s26
      %s29 = sadd.s32 1, %s20
      %s30 = scalar_select %p27, %s29, %s20
      %p31 = scmp.ge.s32.totalorder %s30, 2
      %s32 = scalar_select %p31, 0, %s30
      %s33 = ssub.s32 %s20, %s32
      %p34 = scmp.eq.s32.totalorder %s33, 0
      %s36 = sadd.s32 %s35, 1
      %s37 = scalar_select %p34, %s35, %s36
      %p40 = pneg %p34
      %p41 = scmp.eq.s32.totalorder %s13, 1
      %p42 = por %p40, %p41
      %p43 = scmp.ne.s32.totalorder %s35, %s38
      %p44 = scmp.eq.s32.totalorder %s13, 0
      %p45 = por %p43, %p44
      %p46 = scmp.ne.s32.totalorder %s35, %s38
      %p47 = scmp.eq.s32.totalorder %s18, 1
      %p48 = por %p46, %p47
      %p49 = scmp.ne.s32.totalorder %s38, %s39
      %p50 = scmp.eq.s32.totalorder %s18, 0
      %p51 = por %p49, %p50
      %p52 = scmp.ne.s32.totalorder %s38, %s39
      %p53 = scmp.eq.s32.totalorder %s19, 1
      %p54 = por %p52, %p53
      %p56 = scmp.ne.s32.totalorder %s39, %s55
      %p57 = scmp.eq.s32.totalorder %s19, 0
      %p58 = por %p56, %p57
      %s59 = ssub.s32 %s21, %s28
      %s60 = ssub.s32 %s20, %s32
      %s61 = sor.u32 %s59, %s60
      %p62 = scmp.eq.s32.totalorder %s61, 0
      %s64 = sadd.s32 %s63, 1
      %s65 = scalar_select %p62, %s63, %s64
      %p68 = pneg %p62
      %p69 = scmp.eq.s32.totalorder %s13, 1
      %p70 = por %p68, %p69
      %p71 = scmp.ne.s32.totalorder %s63, %s66
      %p72 = scmp.eq.s32.totalorder %s13, 0
      %p73 = por %p71, %p72
      %p74 = scmp.ne.s32.totalorder %s63, %s66
      %p75 = scmp.eq.s32.totalorder %s18, 1
      %p76 = por %p74, %p75
      %p77 = scmp.ne.s32.totalorder %s66, %s67
      %p78 = scmp.eq.s32.totalorder %s18, 0
      %p79 = por %p77, %p78
      %p80 = scmp.ne.s32.totalorder %s66, %s67
      %p81 = scmp.eq.s32.totalorder %s19, 1
      %p82 = por %p80, %p81
      %p84 = scmp.ne.s32.totalorder %s67, %s83
      %p85 = scmp.eq.s32.totalorder %s19, 0
      %p86 = por %p84, %p85
      %p87 = scmp.le.s32.totalorder 1, %s13
      %p88 = scmp.lt.s32.totalorder %s13, 3
      %p89 = pnand %p87, %p88
      %p90 = pneg %p89
      // Predicated region
      $region9: #{tpu_custom_call.1} parent=5 // pred_check
        _
      $region10: #{tpu_custom_call.1} parent=5 // pred_check_branch
        %92 = sbr.rel (%p89) target = $region12
      $region11: #{tpu_custom_call.1} parent=5 // pred_region
        %s93 = ssub.s32 %s13, 1
      $region12: #{tpu_custom_call.1} parent=5 // pred_fallthru
        _
      %p94 = scmp.lt.s32.totalorder %s13, 2
      // Predicated region
      $region13: #{tpu_custom_call.1} parent=5 // pred_check
        %p95 = pneg %p94
      $region14: #{tpu_custom_call.1} parent=5 // pred_check_branch
        %97 = sbr.rel (%p95) target = $region16
      $region15: #{tpu_custom_call.1} parent=5 // pred_region
        // Predicated region
        $region17: #{tpu_custom_call.1} parent=15 // pred_check
          %p98 = pneg %p45
        $region18: #{tpu_custom_call.1} parent=15 // pred_check_branch
          %100 = sbr.rel (%p98) target = $region20
        $region19: #{tpu_custom_call.1} parent=15 // pred_region
          %s101 = sand.u32 %s35, 1
          %s102 = scalar_lea.sflag [#allocation3], %s101
          %s103 = sand.u32 %s35, 1
          %s104 = scalar_lea.vmem [#allocation2], %s103
          %s106 = ssub.s32 16, 16
          %107 = vsyncadd %s102, %s106
          %s108 = smul.addr %s20, 16
          %s109 = scalar_lea.hbm %s0, %s108
          %s111 = sshll.u32 %s104, 4
          %s112 = int_to_ptr.vmem [resolvable:$true] %s111
          %114 = dma.hbm_to_vmem [thread:$0]  %s109, 16, %s112, %s102
        $region20: #{tpu_custom_call.1} parent=15 // pred_fallthru
          _
      $region16: #{tpu_custom_call.1} parent=5 // pred_fallthru
        _
      %p115 = scmp.le.s32.totalorder 1, %s13
      %p116 = scmp.lt.s32.totalorder %s13, 3
      %p117 = pnand %p115, %p116
      %p118 = pneg %p117
      // Predicated region
      $region21: #{tpu_custom_call.1} parent=5 // pred_check
        _
      $region22: #{tpu_custom_call.1} parent=5 // pred_check_branch
        %120 = sbr.rel (%p117) target = $region24
      $region23: #{tpu_custom_call.1} parent=5 // pred_region
        %s121 = ssub.s32 %s13, 1
        %s122 = sand.u32 %s38, 1
        %s123 = scalar_lea.sflag [#allocation3], %s122
        %s124 = sand.u32 %s38, 1
        %s125 = scalar_lea.vmem [#allocation2], %s124
        // Predicated region
        $region25: #{tpu_custom_call.1} parent=23 // pred_check
          %p126 = pneg %p51
        $region26: #{tpu_custom_call.1} parent=23 // pred_check_branch
          %128 = sbr.rel (%p126) target = $region28
        $region27: #{tpu_custom_call.1} parent=23 // pred_region
          %129 = dma.done %s123, 16
        $region28: #{tpu_custom_call.1} parent=23 // pred_fallthru
          _
        %s130 = sand.u32 %s38, 1
        %s131 = scalar_lea.sflag [#allocation3], %s130
        %s132 = sand.u32 %s38, 1
        %s133 = scalar_lea.vmem [#allocation2], %s132
        %p134 = pneg %p51
        %p135 = pneg %p48
        %p136 = pneg %p79
        %p137 = pneg %p76
        %s138 = sand.u32 %s66, 1
        %s139 = scalar_lea.sflag [#allocation4], %s138
        %s140 = sand.u32 %s66, 1
        %s141 = smul.addr %s140, 2
        %s142 = scalar_lea.vmem [#allocation5], %s141
        %v143 = vld [vmem:[%s125] sm:$0x1]
        %v145 = vlaneseq
        %v146 = vshrl.u32 %v145, 7
        %v147 = vsub.s32 0, %v146
        %v148 = vrot.slane %v143, %v147
        %150 = vst [vmem:[%s142] sm:$0x3] %v148
        %s151 = sand.u32 %s66, 1
        %s152 = scalar_lea.sflag [#allocation4], %s151
        %s153 = sand.u32 %s66, 1
        %s154 = smul.addr %s153, 2
        %s155 = scalar_lea.vmem [#allocation5], %s154
        // Predicated region
        $region29: #{tpu_custom_call.1} parent=23 // pred_check
          %p156 = pneg %p76
        $region30: #{tpu_custom_call.1} parent=23 // pred_check_branch
          %158 = sbr.rel (%p156) target = $region32
        $region31: #{tpu_custom_call.1} parent=23 // pred_region
          %s160 = ssub.s32 32, 32
          %161 = vsyncadd %s152, %s160
          %s162 = smul.addr %s23, 2
          %s163 = sadd.s32 %s22, %s162
          %s164 = smul.addr %s163, 32
          %s165 = scalar_lea.hbm %s1, %s164
          %s167 = sshll.u32 %s155, 4
          %s168 = int_to_ptr.vmem [resolvable:$true] %s167
          %170 = dma.vmem_to_hbm [thread:$0]  %s168, 32, %s165, %s152
        $region32: #{tpu_custom_call.1} parent=23 // pred_fallthru
          _
      $region24: #{tpu_custom_call.1} parent=5 // pred_fallthru
        _
      %p171 = scmp.le.s32.totalorder 2, %s13
      // Predicated region
      $region33: #{tpu_custom_call.1} parent=5 // pred_check
        %p172 = pneg %p171
      $region34: #{tpu_custom_call.1} parent=5 // pred_check_branch
        %174 = sbr.rel (%p172) target = $region36
      $region35: #{tpu_custom_call.1} parent=5 // pred_region
        %s175 = ssub.s32 %s13, 2
        // Predicated region
        $region37: #{tpu_custom_call.1} parent=35 // pred_check
          %p176 = pneg %p82
        $region38: #{tpu_custom_call.1} parent=35 // pred_check_branch
          %178 = sbr.rel (%p176) target = $region40
        $region39: #{tpu_custom_call.1} parent=35 // pred_region
          %s179 = sand.u32 %s67, 1
          %s180 = scalar_lea.sflag [#allocation4], %s179
          %s181 = sand.u32 %s67, 1
          %s182 = smul.addr %s181, 2
          %s183 = scalar_lea.vmem [#allocation5], %s182
          %184 = dma.done %s180, 32
        $region40: #{tpu_custom_call.1} parent=35 // pred_fallthru
          _
      $region36: #{tpu_custom_call.1} parent=5 // pred_fallthru
        _
    $region6: #{tpu_custom_call.1} parent=1 // loop_footer
      %s17 = sadd.s32 1, %s13
    $region7: #{tpu_custom_call.1} parent=1 // loop_footer_branch
      %12 = sbr.rel target = $region3
    $region8: #{tpu_custom_call.1} parent=1 // loop_exit
      _
    %185 = vsyncpa [#allocation3], 1
    %s186 = scalar_lea.sflag [#allocation3], 1
    %187 = vsyncpa %s186, 1
    %188 = vsyncpa [#allocation4], 1
    %s189 = scalar_lea.sflag [#allocation4], 1
    %190 = vsyncpa %s189, 1

</llo_original>
